<compile_context>
chip_gen: v6e
topology: v6e:2x2x1
jax: 0.10.0
libtpu: 0.0.40
codegen_flags: <defaults>
</compile_context>

<pallas_src>
import functools

import jax
import jax.numpy as jnp
from jax.experimental import pallas as pl
from jax.experimental.pallas import tpu as pltpu


def _round_up(n: int, m: int) -> int:
    return ((n + m - 1) // m) * m


def _classifier_head_kernel(x_ref, w1_ref, b1_ref, w2_ref, b2_ref, o_ref, *,
                            compute_dtype):
    # x_ref : (TB, E)   w1_ref: (E, H)   b1_ref: (1, H) f32
    # w2_ref: (H, C)    b2_ref: (1, C) f32   o_ref: (TB, C)
    cd = compute_dtype
    # fc1: MXU matmul with f32 accumulation; bias + ReLU on the f32 accumulator.
    h = jnp.dot(x_ref[...].astype(cd), w1_ref[...].astype(cd),
                preferred_element_type=jnp.float32)
    h = jnp.maximum(h + b1_ref[...].astype(jnp.float32), 0.0)
    # fc2: narrow (C-column) matmul -> only the real logit columns are stored.
    logits = jnp.dot(h.astype(cd), w2_ref[...].astype(cd),
                     preferred_element_type=jnp.float32)
    o_ref[...] = (logits + b2_ref[...].astype(jnp.float32)).astype(o_ref.dtype)


def classifier_head(x, w1, b1, w2, b2, *, block_b=4096,
                    compute_dtype=jnp.bfloat16):
    """x: (B, E) -> logits (B, num_classes).

    Weights are stored (in_features, out_features), so the kernel computes
    relu(x @ w1 + b1) @ w2 + b2, equivalent to PyTorch's Linear layers.
    """
    B, E = x.shape
    E2, H = w1.shape
    H2, C = w2.shape
    assert E2 == E and H2 == H and b1.shape[-1] == H and b2.shape[-1] == C

    # Tiny reshapes only (constant-folded under jit for fixed params).
    b1_2d = b1.reshape(1, H).astype(jnp.float32)
    b2_2d = b2.reshape(1, C).astype(jnp.float32)

    out_dtype = x.dtype
    kernel = functools.partial(_classifier_head_kernel,
                               compute_dtype=compute_dtype)

    x_row_bytes = E * x.dtype.itemsize
    out_row_bytes = C * jnp.dtype(out_dtype).itemsize
    weight_bytes = (E * H + H + H * C + C) * 4          # f32 resident weights
    vmem_budget = 12 * 1024 * 1024                       # safe under v5e's 16 MiB
    assert weight_bytes + 2 * 16 * (x_row_bytes + out_row_bytes) <= vmem_budget, (
        "embedding_dim too large for VMEM-resident weights (E/H tiling not "
        "implemented)")

    block_b = max(16, _round_up(block_b, 16))            # bf16 sublane packing

    single_bytes = weight_bytes + B * (x_row_bytes + out_row_bytes)
    if B <= block_b and single_bytes <= vmem_budget:
        # Small batch: one tile, no grid / pipeline machinery, no padding,
        # no wrapper slice -- a single pallas_call.
        return pl.pallas_call(
            kernel,
            out_shape=jax.ShapeDtypeStruct((B, C), out_dtype),
            in_specs=[pl.BlockSpec(memory_space=pltpu.MemorySpace.VMEM)] * 5,
            out_specs=pl.BlockSpec(memory_space=pltpu.MemorySpace.VMEM),
        )(x, w1, b1_2d, w2, b2_2d)

    # Batch-tiled pipeline: only the x / out streams move per grid step;
    # weights & biases have constant index_maps so they are fetched once and
    # stay VMEM-resident.  Aim for >= 8 grid steps so v7x's two TensorCores
    # each keep a full double-buffered pipeline.
    TB = min(block_b, max(16, _round_up(pl.cdiv(B, 8), 16)))
    while TB > 16 and weight_bytes + 2 * TB * (x_row_bytes + out_row_bytes) > vmem_budget:
        TB = max(16, _round_up(TB // 2, 16))
    grid = pl.cdiv(B, TB)                                # ragged last tile OK

    return pl.pallas_call(
        kernel,
        out_shape=jax.ShapeDtypeStruct((B, C), out_dtype),
        grid=(grid,),
        in_specs=[
            pl.BlockSpec((TB, E), lambda i: (i, 0)),     # x: streams per step
            pl.BlockSpec((E, H), lambda i: (0, 0)),      # w1: resident
            pl.BlockSpec((1, H), lambda i: (0, 0)),      # b1: resident
            pl.BlockSpec((H, C), lambda i: (0, 0)),      # w2: resident
            pl.BlockSpec((1, C), lambda i: (0, 0)),      # b2: resident
        ],
        out_specs=pl.BlockSpec((TB, C), lambda i: (i, 0)),
        compiler_params=pltpu.CompilerParams(
            dimension_semantics=("parallel",),
        ),
    )(x, w1, b1_2d, w2, b2_2d)


def init_params(key, embedding_dim, num_classes=4, hidden=128):
    """Deterministic PyTorch-style init: U(-1/sqrt(fan_in), 1/sqrt(fan_in))."""
    k1, k2, k3, k4 = jax.random.split(key, 4)
    bound1 = 1.0 / jnp.sqrt(embedding_dim)
    bound2 = 1.0 / jnp.sqrt(hidden)
    w1 = jax.random.uniform(k1, (embedding_dim, hidden), jnp.float32, -bound1, bound1)
    b1 = jax.random.uniform(k2, (hidden,), jnp.float32, -bound1, bound1)
    w2 = jax.random.uniform(k3, (hidden, num_classes), jnp.float32, -bound2, bound2)
    b2 = jax.random.uniform(k4, (num_classes,), jnp.float32, -bound2, bound2)
    return w1, b1, w2, b2


def _reference(x, w1, b1, w2, b2, compute_dtype=jnp.float32):
    cd = compute_dtype
    h = jnp.dot(x.astype(cd), w1.astype(cd),
                preferred_element_type=jnp.float32) + b1
    h = jnp.maximum(h, 0.0)
    return jnp.dot(h.astype(cd), w2.astype(cd),
                   preferred_element_type=jnp.float32) + b2


if __name__ == "__main__":
    B, E, C, H = 2, 32, 4, 128
    key = jax.random.PRNGKey(0)
    kx, kp, kx2 = jax.random.split(key, 3)
    x = jax.random.normal(kx, (B, E), jnp.float32)
    w1, b1, w2, b2 = init_params(kp, E, C, H)

    # Small-batch single-tile path (default bf16 compute, f32 accumulate).
    logits = classifier_head(x, w1, b1, w2, b2)
    jax.block_until_ready(logits)
    assert logits.shape == (B, C)
    assert jnp.allclose(logits, _reference(x, w1, b1, w2, b2, jnp.bfloat16),
                        atol=2e-3, rtol=2e-3)
    # Loose sanity check against pure-f32 PyTorch semantics.
    assert jnp.allclose(logits, _reference(x, w1, b1, w2, b2, jnp.float32),
                        atol=1e-1, rtol=1e-1)

    # Optional f32 compute path (PyTorch-exact precision contract).
    logits_f32 = classifier_head(x, w1, b1, w2, b2, compute_dtype=jnp.float32)
    jax.block_until_ready(logits_f32)
    assert jnp.allclose(logits_f32, _reference(x, w1, b1, w2, b2, jnp.float32),
                        atol=5e-3, rtol=5e-3)

    # Batch-tiled ("parallel" grid) path with a ragged last tile and a
    # non-multiple-of-16 block_b (gets rounded; TB capped so grid >= ~8 steps).
    Bt = 200
    xt = jax.random.normal(kx2, (Bt, E), jnp.float32)
    logits_t = classifier_head(xt, w1, b1, w2, b2, block_b=56)
    jax.block_until_ready(logits_t)
    assert logits_t.shape == (Bt, C)
    assert jnp.allclose(logits_t, _reference(xt, w1, b1, w2, b2, jnp.bfloat16),
                        atol=2e-3, rtol=2e-3)

    print("KERNEL_OK")
</pallas_src>

<mosaic_0001>
module attributes {stable_mosaic.version = 11 : i64} {
  func.func @_classifier_head_kernel(%arg0: memref<2x32xf32, #tpu.memory_space<vmem>>, %arg1: memref<32x128xf32, #tpu.memory_space<vmem>>, %arg2: memref<1x128xf32, #tpu.memory_space<vmem>>, %arg3: memref<128x4xf32, #tpu.memory_space<vmem>>, %arg4: memref<1x4xf32, #tpu.memory_space<vmem>>, %arg5: memref<2x4xf32, #tpu.memory_space<vmem>>) attributes {dimension_semantics = [], scalar_prefetch = 0 : i64, scratch_operands = 0 : i64, tpu.core_type = #tpu.core_type<tc>} {
    %c0 = arith.constant 0 : index
    %c0_0 = arith.constant 0 : index
    %0 = vector.load %arg0[%c0, %c0_0] : memref<2x32xf32, #tpu.memory_space<vmem>>, vector<2x32xf32>
    %1 = arith.truncf %0 : vector<2x32xf32> to vector<2x32xbf16>
    %c0_1 = arith.constant 0 : index
    %c0_2 = arith.constant 0 : index
    %2 = vector.load %arg1[%c0_1, %c0_2] : memref<32x128xf32, #tpu.memory_space<vmem>>, vector<32x128xf32>
    %3 = arith.truncf %2 : vector<32x128xf32> to vector<32x128xbf16>
    %cst = arith.constant dense<0.000000e+00> : vector<2x128xf32>
    %4 = tpu.matmul %1, %3, %cst {dimension_numbers = #tpu.dot_dimension_numbers<[1], [0], [0], [1], [0, 0, 1, 1], [], []>} : vector<2x32xbf16>, vector<32x128xbf16>, vector<2x128xf32> -> vector<2x128xf32>
    %c0_3 = arith.constant 0 : index
    %c0_4 = arith.constant 0 : index
    %5 = vector.load %arg2[%c0_3, %c0_4] : memref<1x128xf32, #tpu.memory_space<vmem>>, vector<1x128xf32>
    %6 = vector.broadcast %5 : vector<1x128xf32> to vector<2x128xf32>
    %7 = arith.addf %4, %6 : vector<2x128xf32>
    %cst_5 = arith.constant 0.000000e+00 : f32
    %8 = vector.broadcast %cst_5 : f32 to vector<2x128xf32>
    %9 = arith.maximumf %7, %8 : vector<2x128xf32>
    %10 = arith.truncf %9 : vector<2x128xf32> to vector<2x128xbf16>
    %c0_6 = arith.constant 0 : index
    %c0_7 = arith.constant 0 : index
    %11 = vector.load %arg3[%c0_6, %c0_7] : memref<128x4xf32, #tpu.memory_space<vmem>>, vector<128x4xf32>
    %12 = arith.truncf %11 : vector<128x4xf32> to vector<128x4xbf16>
    %cst_8 = arith.constant dense<0.000000e+00> : vector<2x4xf32>
    %13 = tpu.matmul %10, %12, %cst_8 {dimension_numbers = #tpu.dot_dimension_numbers<[1], [0], [0], [1], [0, 0, 1, 1], [], []>} : vector<2x128xbf16>, vector<128x4xbf16>, vector<2x4xf32> -> vector<2x4xf32>
    %c0_9 = arith.constant 0 : index
    %c0_10 = arith.constant 0 : index
    %14 = vector.load %arg4[%c0_9, %c0_10] : memref<1x4xf32, #tpu.memory_space<vmem>>, vector<1x4xf32>
    %15 = vector.broadcast %14 : vector<1x4xf32> to vector<2x4xf32>
    %16 = arith.addf %13, %15 : vector<2x4xf32>
    %c0_11 = arith.constant 0 : index
    %c0_12 = arith.constant 0 : index
    %17 = vector.load %arg5[%c0_11, %c0_12] : memref<2x4xf32, #tpu.memory_space<vmem>>, vector<2x4xf32>
    tpu.vector_store %arg5[%c0_11, %c0_12], %16 {strides = array<i32>} : memref<2x4xf32, #tpu.memory_space<vmem>>, vector<2x4xf32>,
    return
  }
}

</mosaic_0001>

<llo_original>
// kernel: tpu_custom_call.1
$region0: #{tpu_custom_call.1}
  #allocation0 [shape = 'u32[]', space=smem, size = 0x4, offset = 0x4, fixed_abs, tag = 'smem constant byte address 0x4 - core index']
  #allocation1 [shape = 'u32[144,128]{1,0:T(1,128)}', space=vmem, size = 0x12000, scoped, tag = 'internal scratch']
  %s0 = inlined_call_operand.vmem [shape: f32[2,32], index: 0, kind: input, shape index: {}]
  %s1 = inlined_call_operand.vmem [shape: f32[32,128], index: 1, kind: input, shape index: {}]
  %s2 = inlined_call_operand.vmem [shape: f32[1,128], index: 2, kind: input, shape index: {}]
  %s3 = inlined_call_operand.vmem [shape: f32[128,4], index: 3, kind: input, shape index: {}]
  %s4 = inlined_call_operand.vmem [shape: f32[1,4], index: 4, kind: input, shape index: {}]
  %s5 = inlined_call_operand.hbm [shape: f32[2,4], index: 5, kind: output, shape index: {}]
  %s6 = sld [smem:[#allocation0]]
  $region30: #{tpu_custom_call.1} parent=0
    _
  %s8 = ssub.s32 1, %s6
  %s9 = scalar_select 0, %s8, %s6
  $region1: #{tpu_custom_call.1} parent=0
    #allocation2 [shape = 'u8[1024]{0}', space=vmem, size = 0x400, scoped, tag = 'output window, operand 0, single buffered']
    #allocation3 [shape = 's32[1]{0}', space=sflag, size = 0x4, scoped, tag = 'scoped memory for tpu_custom_call.1']
    %10 = vsyncpa [#allocation3], 0
    // Predicated region
    $region2: #{tpu_custom_call.1} parent=1 // pred_check
      _
    $region3: #{tpu_custom_call.1} parent=1 // pred_check_branch
      %12 = sbr.rel (0) target = $region5
    $region4: #{tpu_custom_call.1} parent=1 // pred_region
      _
    $region5: #{tpu_custom_call.1} parent=1 // pred_fallthru
      _
    // Predicated region
    $region6: #{tpu_custom_call.1} parent=1 // pred_check
      _
    $region7: #{tpu_custom_call.1} parent=1 // pred_check_branch
      %14 = sbr.rel (0) target = $region9
    $region8: #{tpu_custom_call.1} parent=1 // pred_region
      _
    $region9: #{tpu_custom_call.1} parent=1 // pred_fallthru
      _
    // Predicated region
    $region10: #{tpu_custom_call.1} parent=1 // pred_check
      _
    $region11: #{tpu_custom_call.1} parent=1 // pred_check_branch
      %16 = sbr.rel (0) target = $region13
    $region12: #{tpu_custom_call.1} parent=1 // pred_region
      _
    $region13: #{tpu_custom_call.1} parent=1 // pred_fallthru
      _
    // Predicated region
    $region14: #{tpu_custom_call.1} parent=1 // pred_check
      _
    $region15: #{tpu_custom_call.1} parent=1 // pred_check_branch
      %18 = sbr.rel (0) target = $region17
    $region16: #{tpu_custom_call.1} parent=1 // pred_region
      _
    $region17: #{tpu_custom_call.1} parent=1 // pred_fallthru
      _
    // Predicated region
    $region18: #{tpu_custom_call.1} parent=1 // pred_check
      _
    $region19: #{tpu_custom_call.1} parent=1 // pred_check_branch
      %20 = sbr.rel (0) target = $region21
    $region20: #{tpu_custom_call.1} parent=1 // pred_region
      _
    $region21: #{tpu_custom_call.1} parent=1 // pred_fallthru
      _
    %v22 = vld [vmem:[%s0] sm:$0x3]
    %v23 = vpack.c.bf16 %v22, %v22
    %v24 = vld [vmem:[%s1] sm:$0xff]
    %v25 = vld [vmem:[%s1 + $0x8] sm:$0xff]
    %v26 = vld [vmem:[%s1 + $0x10] sm:$0xff]
    %v27 = vld [vmem:[%s1 + $0x18] sm:$0xff]
    %v28 = vpack.c.bf16 %v25, %v24
    %v29 = vpack.c.bf16 %v27, %v26
    %v30 = vld [vmem:[%s2] sm:$0x1]
    %v32 = vlaneseq
    %v33 = vshrl.u32 %v32, 7
    %v34 = vsub.s32 0, %v33
    %v35 = vrot.slane %v30, %v34
    %vm37 = vcmask 261120
    %v39 = vsel %vm37, %v23, 0
    %41 = vmatprep.subr.bf16.mxu0 0
    %42 = vmatpush1.bf16.msra.mxu0 0
    %43 = vmatprep.subr.bf16.mxu0 0
    %44 = vmatpush1.bf16.msra.mxu0 0
    %45 = vmatprep.subr.bf16.mxu0 0
    %46 = vmatpush1.bf16.msra.mxu0 0
    %47 = vmatprep.subr.bf16.mxu0 0
    %48 = vmatpush1.bf16.msra.mxu0 0
    %49 = vmatprep.subr.bf16.mxu0 0
    %50 = vmatpush1.bf16.msra.mxu0 0
    %51 = vmatprep.subr.bf16.mxu0 0
    %52 = vmatpush1.bf16.msra.mxu0 0
    %53 = vmatprep.subr.bf16.mxu0 0
    %54 = vmatpush1.bf16.msra.mxu0 %v29
    %55 = vmatprep.subr.bf16.mxu0 0
    %56 = vmatpush1.bf16.msra.mxu0 %v28
    %57 = vmatprep.subr.bf16.mxu0 0
    %58 = vmatpush2.bf16.msra.mxu0 0
    %59 = vmatprep.subr.bf16.mxu0 0
    %60 = vmatpush2.bf16.msra.mxu0 0
    %61 = vmatprep.subr.bf16.mxu0 0
    %62 = vmatpush2.bf16.msra.mxu0 0
    %63 = vmatprep.subr.bf16.mxu0 0
    %64 = vmatpush2.bf16.msra.mxu0 0
    %65 = vmatprep.subr.bf16.mxu0 0
    %66 = vmatpush2.bf16.msra.mxu0 0
    %67 = vmatprep.subr.bf16.mxu0 0
    %68 = vmatpush2.bf16.msra.mxu0 0
    %69 = vmatprep.subr.bf16.mxu0 0
    %70 = vmatpush2.bf16.msra.mxu0 0
    %71 = vmatprep.subr.bf16.mxu0 0
    %72 = vmatpush2.bf16.msra.mxu0 0
    %73 = vmatprep.mubr.bf16.mxu0 0
    %74 = vmatmul.mubr.bf16.gmra.mxu0 %v39
    %v75 = vpop.f32.mrf.mxu0
    %v76 = vadd.f32 %v35, %v75
    %v77 = vpop.f32.mrf.mxu0
    %v78 = vpop.f32.mrf.mxu0
    %v79 = vpop.f32.mrf.mxu0
    %80 = vdwg.mxu0
    %v81 = vmax.f32 %v76, 0.0
    %v82 = vpack.c.bf16 %v81, %v81
    %v83 = vld [vmem:[%s3] sm:$0xff]
    %v84 = vld [vmem:[%s3 + $0x8] sm:$0xff]
    %v85 = vld [vmem:[%s3 + $0x10] sm:$0xff]
    %v86 = vld [vmem:[%s3 + $0x18] sm:$0xff]
    %v87 = vld [vmem:[%s3 + $0x20] sm:$0xff]
    %v88 = vld [vmem:[%s3 + $0x28] sm:$0xff]
    %v89 = vld [vmem:[%s3 + $0x30] sm:$0xff]
    %v90 = vld [vmem:[%s3 + $0x38] sm:$0xff]
    %v91 = vld [vmem:[%s3 + $0x40] sm:$0xff]
    %v92 = vld [vmem:[%s3 + $0x48] sm:$0xff]
    %v93 = vld [vmem:[%s3 + $0x50] sm:$0xff]
    %v94 = vld [vmem:[%s3 + $0x58] sm:$0xff]
    %v95 = vld [vmem:[%s3 + $0x60] sm:$0xff]
    %v96 = vld [vmem:[%s3 + $0x68] sm:$0xff]
    %v97 = vld [vmem:[%s3 + $0x70] sm:$0xff]
    %v98 = vld [vmem:[%s3 + $0x78] sm:$0xff]
    %v99 = vpack.c.bf16 %v84, %v83
    %v100 = vpack.c.bf16 %v86, %v85
    %v101 = vpack.c.bf16 %v88, %v87
    %v102 = vpack.c.bf16 %v90, %v89
    %v103 = vpack.c.bf16 %v92, %v91
    %v104 = vpack.c.bf16 %v94, %v93
    %v105 = vpack.c.bf16 %v96, %v95
    %v106 = vpack.c.bf16 %v98, %v97
    %v107 = vld [vmem:[%s4] sm:$0x1]
    %v109 = vlaneseq
    %v110 = vshrl.u32 %v109, 7
    %v111 = vsub.s32 0, %v110
    %v112 = vrot.slane %v107, %v111
    %114 = vmatprep.subr.bf16.mxu0 0
    %115 = vmatpush1.bf16.msra.mxu0 %v106
    %116 = vmatprep.subr.bf16.mxu0 0
    %117 = vmatpush1.bf16.msra.mxu0 %v105
    %118 = vmatprep.subr.bf16.mxu0 0
    %119 = vmatpush1.bf16.msra.mxu0 %v104
    %120 = vmatprep.subr.bf16.mxu0 0
    %121 = vmatpush1.bf16.msra.mxu0 %v103
    %122 = vmatprep.subr.bf16.mxu0 0
    %123 = vmatpush1.bf16.msra.mxu0 %v102
    %124 = vmatprep.subr.bf16.mxu0 0
    %125 = vmatpush1.bf16.msra.mxu0 %v101
    %126 = vmatprep.subr.bf16.mxu0 0
    %127 = vmatpush1.bf16.msra.mxu0 %v100
    %128 = vmatprep.subr.bf16.mxu0 0
    %129 = vmatpush1.bf16.msra.mxu0 %v99
    %130 = vmatprep.subr.bf16.mxu0 0
    %131 = vmatpush2.bf16.msra.mxu0 0
    %132 = vmatprep.subr.bf16.mxu0 0
    %133 = vmatpush2.bf16.msra.mxu0 0
    %134 = vmatprep.subr.bf16.mxu0 0
    %135 = vmatpush2.bf16.msra.mxu0 0
    %136 = vmatprep.subr.bf16.mxu0 0
    %137 = vmatpush2.bf16.msra.mxu0 0
    %138 = vmatprep.subr.bf16.mxu0 0
    %139 = vmatpush2.bf16.msra.mxu0 0
    %140 = vmatprep.subr.bf16.mxu0 0
    %141 = vmatpush2.bf16.msra.mxu0 0
    %142 = vmatprep.subr.bf16.mxu0 0
    %143 = vmatpush2.bf16.msra.mxu0 0
    %144 = vmatprep.subr.bf16.mxu0 0
    %145 = vmatpush2.bf16.msra.mxu0 0
    %146 = vmatprep.mubr.bf16.mxu0 0
    %147 = vmatmul.mubr.bf16.gmra.mxu0 %v82
    %v148 = vpop.f32.mrf.mxu0
    %v149 = vadd.f32 %v112, %v148
    %v150 = vpop.f32.mrf.mxu0
    %v151 = vpop.f32.mrf.mxu0
    %v152 = vpop.f32.mrf.mxu0
    %153 = vdwg.mxu0
    %vm154 = vcmask 25600
    %155 = vst.msk [vmem:[#allocation2] sm:$0x3] %vm154, %v149
    // Predicated region
    $region22: #{tpu_custom_call.1} parent=1 // pred_check
      _
    $region23: #{tpu_custom_call.1} parent=1 // pred_check_branch
      %157 = sbr.rel (0) target = $region25
    $region24: #{tpu_custom_call.1} parent=1 // pred_region
      %s159 = ssub.s32 32, 32
      %160 = vsyncadd [#allocation3], %s159
      %s162 = sshll.u32 [#allocation2], 4
      %s163 = int_to_ptr.vmem [resolvable:$true] %s162
      %165 = dma.vmem_to_hbm [thread:$0]  %s163, 32, %s5, [#allocation3]
    $region25: #{tpu_custom_call.1} parent=1 // pred_fallthru
      _
    // Predicated region
    $region26: #{tpu_custom_call.1} parent=1 // pred_check
      _
    $region27: #{tpu_custom_call.1} parent=1 // pred_check_branch
      %167 = sbr.rel (0) target = $region29
    $region28: #{tpu_custom_call.1} parent=1 // pred_region
      %168 = dma.done [#allocation3], 32
    $region29: #{tpu_custom_call.1} parent=1 // pred_fallthru
      _
    %169 = vsyncpa [#allocation3], 1

</llo_original>
